<compile_context>
chip_gen: v7x
topology: tpu7x:2x2x1
jax: 0.10.0
libtpu: 0.0.40
codegen_flags: <defaults>
</compile_context>

<pallas_src>
import math
from typing import NamedTuple

import jax
import jax.numpy as jnp
from jax.experimental import pallas as pl
from jax.experimental.pallas import tpu as pltpu


def _round_up(x, m):
    return ((x + m - 1) // m) * m


# -----------------------------------------------------------------------------
# Kernels
# -----------------------------------------------------------------------------
def _gelu_exact_f32(h):
    # Exact (erf) GELU in f32 -- matches torch.nn.GELU() default.
    return 0.5 * h * (1.0 + jax.lax.erf(h * (1.0 / math.sqrt(2.0))))


def _ff_kernel_resident(x_ref, w1_ref, b1_ref, w2_ref, b2_ref, o_ref):
    """Weights VMEM-resident; grid = (row tiles,)."""
    xb = x_ref[...].astype(w1_ref.dtype)
    h = jnp.dot(xb, w1_ref[...], preferred_element_type=jnp.float32) + b1_ref[...]
    h = _gelu_exact_f32(h)
    # Dropout(p=0.0) is the identity -> nothing to do.
    o_ref[...] = (jnp.dot(h.astype(w2_ref.dtype), w2_ref[...],
                          preferred_element_type=jnp.float32)
                  + b2_ref[...]).astype(o_ref.dtype)


def _ff_kernel_streaming(x_ref, w1_ref, b1_ref, w2_ref, b2_ref, o_ref, acc_ref):
    """Inner dim tiled as trailing reduction axis; grid = (row tiles, inner chunks)."""
    k = pl.program_id(1)

    @pl.when(k == 0)
    def _():
        acc_ref[...] = jnp.zeros_like(acc_ref)

    xb = x_ref[...].astype(w1_ref.dtype)
    h = jnp.dot(xb, w1_ref[...], preferred_element_type=jnp.float32) + b1_ref[...]
    h = _gelu_exact_f32(h)
    # Dropout(p=0.0) is the identity.
    acc_ref[...] += jnp.dot(h.astype(w2_ref.dtype), w2_ref[...],
                            preferred_element_type=jnp.float32)

    @pl.when(k == pl.num_programs(1) - 1)
    def _():
        o_ref[...] = (acc_ref[...] + b2_ref[...]).astype(o_ref.dtype)


# -----------------------------------------------------------------------------
# Parameter preparation (one-time, out of the hot path)
# -----------------------------------------------------------------------------
class FFParams(NamedTuple):
    w1: jax.Array   # (dim, inner_pad)   compute dtype (bf16)
    b1: jax.Array   # (1, inner_pad)     f32
    w2: jax.Array   # (inner_pad, n_pad) compute dtype (bf16)
    b2: jax.Array   # (1, n_pad)         f32
    dim_out: int    # original (unpadded) output dim


def prepare_feedforward_params(w1, b1, w2, b2, compute_dtype=jnp.bfloat16):
    """Pre-cast and pre-pad the weights once (not per call).

    * dim_out is padded to a multiple of 128 (lane-dense output).
    * inner is padded to a multiple of 128 so a multiple-of-128 reduction tile always
      exists.  Both pads are exact: padded W1 columns + zero b1 give GELU(0) = 0,
      which multiplies zero W2 rows / zero b2 entries.
    """
    dim, inner = w1.shape
    dim_out = w2.shape[1]
    i_pad = _round_up(inner, 128)
    n_pad = _round_up(dim_out, 128)
    if i_pad != inner:
        w1 = jnp.pad(w1, ((0, 0), (0, i_pad - inner)))
        b1 = jnp.pad(b1, ((0, i_pad - inner),))
        w2 = jnp.pad(w2, ((0, i_pad - inner), (0, 0)))
    if n_pad != dim_out:
        w2 = jnp.pad(w2, ((0, 0), (0, n_pad - dim_out)))
        b2 = jnp.pad(b2, ((0, n_pad - dim_out),))
    return FFParams(
        w1=w1.astype(compute_dtype),
        b1=b1.reshape(1, i_pad).astype(jnp.float32),
        w2=w2.astype(compute_dtype),
        b2=b2.reshape(1, n_pad).astype(jnp.float32),
        dim_out=int(dim_out),
    )


# -----------------------------------------------------------------------------
# Generation-aware tile selection
# -----------------------------------------------------------------------------
def _tpu_generation_and_vmem():
    vmem_cap = 64 * 1024 * 1024  # conservative (v7x per-TensorCore) fallback
    try:
        info = pltpu.get_tpu_info()
        cap = int(getattr(info, "vmem_capacity_bytes", 0) or 0)
        if cap > 0:
            vmem_cap = cap
    except Exception:
        pass
    gen = 0
    try:
        kind = jax.devices()[0].device_kind.lower()
        for g in (7, 6, 5, 4):
            if ("v%d" % g) in kind:
                gen = g
                break
    except Exception:
        pass
    return gen, vmem_cap


def _select_tiles(M, dim, i_pad, n_pad, x_bytes, c_bytes, out_bytes):
    gen, vmem_cap = _tpu_generation_and_vmem()
    if gen == 5:        # v5e: roofline crossover ~240 flops/byte; 128 MiB VMEM
        tm_cap, tk_target = 384, 512
    elif gen == 6:      # v6e: ~640 flops/byte crossover; 128 MiB VMEM -> big tiles
        tm_cap, tk_target = 1024, 1024
    elif gen == 7:      # v7x: 64 MiB VMEM per TC
        tm_cap, tk_target = 512, 512
    else:
        tm_cap, tk_target = 512, 512
    budget = int(vmem_cap * 0.82)

    def footprint(tm, tk, needs_acc):
        f = 2 * tm * dim * x_bytes          # x tile (double-buffered)
        f += 2 * dim * tk * c_bytes         # W1 tile
        f += 2 * tk * n_pad * c_bytes       # W2 tile
        f += 2 * (tk + n_pad) * 4           # biases (f32)
        f += 2 * tm * n_pad * out_bytes     # output tile
        if needs_acc:
            f += tm * n_pad * 4             # f32 accumulator scratch
        return f

    M_cap = _round_up(max(M, 1), 8)

    def pick_tm(tk, needs_acc):
        tm = min(tm_cap, M_cap)
        if tm > 128:
            tm = (tm // 128) * 128
        tm = max(tm, 8)
        while tm > 8 and footprint(tm, tk, needs_acc) > budget:
            tm = tm - 128 if tm > 128 else max(8, (tm // 2 // 8) * 8)
        return tm

    # Prefer the weights-resident layout when the (double-buffered) weight tiles plus
    # at least a 128-row tile fit the budget.
    if footprint(min(128, M_cap), i_pad, needs_acc=False) <= budget:
        tk = i_pad
    else:
        # Largest tk <= target that divides i_pad and is a multiple of 128 (i_pad is a
        # multiple of 128, so tk = 128 always qualifies -> never falls back to inner).
        tk = 128
        target = min(tk_target, i_pad)
        for cand in range(target - (target % 128), 127, -128):
            if i_pad % cand == 0:
                tk = cand
                break
    grid_k = i_pad // tk
    needs_acc = grid_k > 1
    tm = pick_tm(tk, needs_acc)
    grid_m = (M + tm - 1) // tm

    fp = footprint(tm, tk, needs_acc)
    vmem_limit = min(int(vmem_cap * 0.92), max(32 * 1024 * 1024, fp + (8 << 20)))
    vmem_limit = max(vmem_limit, fp + (2 << 20))
    vmem_limit = min(vmem_limit, vmem_cap)
    return tm, tk, grid_m, grid_k, vmem_limit


# -----------------------------------------------------------------------------
# Wrapper
# -----------------------------------------------------------------------------
def feedforward_pallas(x, params: FFParams, *, out_dtype=None):
    """FeedForward (glu=False, dropout=0): x (..., dim) -> (..., dim_out).

    `params` comes from prepare_feedforward_params (weights pre-cast / pre-padded).
    `out_dtype` defaults to x.dtype; pass jnp.bfloat16 to halve output HBM writeback
    when downstream tolerates it.
    """
    orig_shape = x.shape
    dim = orig_shape[-1]
    out_dtype = x.dtype if out_dtype is None else out_dtype
    i_pad = params.w1.shape[1]
    n_pad = params.w2.shape[1]
    dim_out = params.dim_out
    assert params.w1.shape[0] == dim, "x feature dim does not match W1"

    x2 = x.reshape(-1, dim)
    M = x2.shape[0]

    x_bytes = jnp.dtype(x2.dtype).itemsize
    c_bytes = jnp.dtype(params.w1.dtype).itemsize
    out_bytes = jnp.dtype(out_dtype).itemsize

    tm, tk, grid_m, grid_k, vmem_limit = _select_tiles(
        M, dim, i_pad, n_pad, x_bytes, c_bytes, out_bytes)

    # Streaming path re-streams W1/W2 once per row tile; resident path streams once.
    weight_passes = 1 if grid_k == 1 else grid_m
    cost = pl.CostEstimate(
        flops=2 * M * dim * i_pad + 2 * M * i_pad * n_pad,
        transcendentals=M * i_pad,
        bytes_accessed=(M * dim * x_bytes
                        + weight_passes * (dim * i_pad + i_pad * n_pad) * c_bytes
                        + (i_pad + n_pad) * 4
                        + M * n_pad * out_bytes),
    )
    out_shape = jax.ShapeDtypeStruct((M, n_pad), out_dtype)

    if grid_k == 1:
        # Weights VMEM-resident: constant block indices -> W1/W2 DMA'd exactly once.
        def run(single_buffer_weights):
            def w_spec(shape):
                if single_buffer_weights and hasattr(pl, "Buffered"):
                    try:
                        return pl.BlockSpec(shape, lambda i: (0, 0),
                                            pipeline_mode=pl.Buffered(1))
                    except TypeError:
                        pass
                return pl.BlockSpec(shape, lambda i: (0, 0))

            return pl.pallas_call(
                _ff_kernel_resident,
                out_shape=out_shape,
                grid_spec=pltpu.PrefetchScalarGridSpec(
                    num_scalar_prefetch=0,
                    grid=(grid_m,),
                    in_specs=[
                        pl.BlockSpec((tm, dim), lambda i: (i, 0)),    # x row tile
                        w_spec((dim, i_pad)),                         # W1 (resident)
                        pl.BlockSpec((1, i_pad), lambda i: (0, 0)),   # b1
                        w_spec((i_pad, n_pad)),                       # W2 (resident)
                        pl.BlockSpec((1, n_pad), lambda i: (0, 0)),   # b2
                    ],
                    out_specs=pl.BlockSpec((tm, n_pad), lambda i: (i, 0)),
                ),
                compiler_params=pltpu.CompilerParams(
                    dimension_semantics=("parallel",),
                    vmem_limit_bytes=vmem_limit,
                ),
                cost_estimate=cost,
            )(x2, params.w1, params.b1, params.w2, params.b2)

        try:
            out = run(True)
        except Exception:
            # pl.Buffered(1) unsupported on this jax version -> plain double buffers.
            out = run(False)
    else:
        out = pl.pallas_call(
            _ff_kernel_streaming,
            out_shape=out_shape,
            grid_spec=pltpu.PrefetchScalarGridSpec(
                num_scalar_prefetch=0,
                grid=(grid_m, grid_k),
                in_specs=[
                    pl.BlockSpec((tm, dim), lambda i, k: (i, 0)),     # x row tile
                    pl.BlockSpec((dim, tk), lambda i, k: (0, k)),     # W1 inner-chunk
                    pl.BlockSpec((1, tk), lambda i, k: (0, k)),       # b1 chunk
                    pl.BlockSpec((tk, n_pad), lambda i, k: (k, 0)),   # W2 inner-chunk
                    pl.BlockSpec((1, n_pad), lambda i, k: (0, 0)),    # b2
                ],
                out_specs=pl.BlockSpec((tm, n_pad), lambda i, k: (i, 0)),
                scratch_shapes=[pltpu.VMEM((tm, n_pad), jnp.float32)],
            ),
            compiler_params=pltpu.CompilerParams(
                dimension_semantics=("parallel", "arbitrary"),
                vmem_limit_bytes=vmem_limit,
            ),
            cost_estimate=cost,
        )(x2, params.w1, params.b1, params.w2, params.b2)

    # TODO(synk): for tiny-M (decode) shapes on v7x, add a second parallel grid axis
    # over n_pad so both TensorCores get work even when grid_m == 1.
    if n_pad != dim_out:
        out = out[:, :dim_out]
    return out.reshape(*orig_shape[:-1], dim_out)


def init_feedforward_params(key, dim, dim_out=None, mult=4):
    """Mirror nn.Linear default init (uniform +/- 1/sqrt(fan_in)); weights (in, out)."""
    inner_dim = int(dim * mult)
    dim_out = dim if dim_out is None else dim_out
    k1, k2, k3, k4 = jax.random.split(key, 4)
    bound1 = 1.0 / math.sqrt(dim)
    bound2 = 1.0 / math.sqrt(inner_dim)
    w1 = jax.random.uniform(k1, (dim, inner_dim), jnp.float32, -bound1, bound1)
    b1 = jax.random.uniform(k2, (inner_dim,), jnp.float32, -bound1, bound1)
    w2 = jax.random.uniform(k3, (inner_dim, dim_out), jnp.float32, -bound2, bound2)
    b2 = jax.random.uniform(k4, (dim_out,), jnp.float32, -bound2, bound2)
    return w1, b1, w2, b2


if __name__ == "__main__":
    key = jax.random.PRNGKey(0)
    kx, kp = jax.random.split(key)

    # FeedForward(dim=32, glu=False, mult=4) -> inner=128, dim_out=32
    batch, seq, dim = 2, 8, 32
    x = jax.random.normal(kx, (batch, seq, dim), jnp.float32)
    w1, b1, w2, b2 = init_feedforward_params(kp, dim, dim_out=None, mult=4)

    params = prepare_feedforward_params(w1, b1, w2, b2)   # one-time prep
    y = feedforward_pallas(x, params)
    y = jax.block_until_ready(y)
    assert y.shape == (batch, seq, dim)

    # Reference with the same bf16-operand / f32-accumulate numerics.
    xb = x.reshape(-1, dim).astype(jnp.bfloat16)
    h_ref = jnp.dot(xb, w1.astype(jnp.bfloat16),
                    preferred_element_type=jnp.float32) + b1
    h_ref = 0.5 * h_ref * (1.0 + jax.lax.erf(h_ref / math.sqrt(2.0)))
    y_ref = jnp.dot(h_ref.astype(jnp.bfloat16), w2.astype(jnp.bfloat16),
                    preferred_element_type=jnp.float32) + b2
    y_ref = y_ref.reshape(batch, seq, dim).astype(x.dtype)

    err = float(jnp.max(jnp.abs(y.astype(jnp.float32) - y_ref.astype(jnp.float32))))
    assert err < 2e-2, err

    print("KERNEL_OK")
</pallas_src>

<mosaic_0001>
module attributes {stable_mosaic.version = 11 : i64} {
  func.func @_ff_kernel_resident(%arg0: i32, %arg1: memref<16x32xf32, #tpu.memory_space<vmem>>, %arg2: memref<32x128xbf16, #tpu.memory_space<vmem>>, %arg3: memref<1x128xf32, #tpu.memory_space<vmem>>, %arg4: memref<128x128xbf16, #tpu.memory_space<vmem>>, %arg5: memref<1x128xf32, #tpu.memory_space<vmem>>, %arg6: memref<16x128xf32, #tpu.memory_space<vmem>>) attributes {dimension_semantics = [#tpu.dimension_semantics<parallel>], iteration_bounds = array<i64: 1>, scalar_prefetch = 0 : i64, scratch_operands = 0 : i64, tpu.core_type = #tpu.core_type<tc>, window_params = [{transform_indices = @transform_0, window_bounds = array<i64: 16, 32>}, {pipeline_mode = #tpu.pipeline_mode<synchronous>, transform_indices = @transform_1, window_bounds = array<i64: 32, 128>}, {pipeline_mode = #tpu.pipeline_mode<synchronous>, transform_indices = @transform_2, window_bounds = array<i64: 1, 128>}, {pipeline_mode = #tpu.pipeline_mode<synchronous>, transform_indices = @transform_3, window_bounds = array<i64: 128, 128>}, {pipeline_mode = #tpu.pipeline_mode<synchronous>, transform_indices = @transform_4, window_bounds = array<i64: 1, 128>}, {transform_indices = @transform_5, window_bounds = array<i64: 16, 128>}]} {
    %c0 = arith.constant 0 : index
    %c0_0 = arith.constant 0 : index
    %0 = vector.load %arg1[%c0, %c0_0] : memref<16x32xf32, #tpu.memory_space<vmem>>, vector<16x32xf32>
    %1 = arith.truncf %0 : vector<16x32xf32> to vector<16x32xbf16>
    %c0_1 = arith.constant 0 : index
    %c0_2 = arith.constant 0 : index
    %2 = vector.load %arg2[%c0_1, %c0_2] : memref<32x128xbf16, #tpu.memory_space<vmem>>, vector<32x128xbf16>
    %cst = arith.constant dense<0.000000e+00> : vector<16x128xf32>
    %3 = tpu.matmul %1, %2, %cst {dimension_numbers = #tpu.dot_dimension_numbers<[1], [0], [0], [1], [0, 0, 1, 1], [], []>} : vector<16x32xbf16>, vector<32x128xbf16>, vector<16x128xf32> -> vector<16x128xf32>
    %c0_3 = arith.constant 0 : index
    %c0_4 = arith.constant 0 : index
    %4 = vector.load %arg3[%c0_3, %c0_4] : memref<1x128xf32, #tpu.memory_space<vmem>>, vector<1x128xf32>
    %5 = vector.broadcast %4 : vector<1x128xf32> to vector<16x128xf32>
    %6 = arith.addf %3, %5 : vector<16x128xf32>
    %cst_5 = arith.constant 5.000000e-01 : f32
    %7 = vector.broadcast %cst_5 : f32 to vector<16x128xf32>
    %8 = arith.mulf %7, %6 : vector<16x128xf32>
    %cst_6 = arith.constant 0.707106769 : f32
    %9 = vector.broadcast %cst_6 : f32 to vector<16x128xf32>
    %10 = arith.mulf %6, %9 : vector<16x128xf32>
    %11 = math.erf %10 : vector<16x128xf32>
    %cst_7 = arith.constant 1.000000e+00 : f32
    %12 = vector.broadcast %cst_7 : f32 to vector<16x128xf32>
    %13 = arith.addf %12, %11 : vector<16x128xf32>
    %14 = arith.mulf %8, %13 : vector<16x128xf32>
    %15 = arith.truncf %14 : vector<16x128xf32> to vector<16x128xbf16>
    %c0_8 = arith.constant 0 : index
    %c0_9 = arith.constant 0 : index
    %16 = vector.load %arg4[%c0_8, %c0_9] : memref<128x128xbf16, #tpu.memory_space<vmem>>, vector<128x128xbf16>
    %cst_10 = arith.constant dense<0.000000e+00> : vector<16x128xf32>
    %17 = tpu.matmul %15, %16, %cst_10 {dimension_numbers = #tpu.dot_dimension_numbers<[1], [0], [0], [1], [0, 0, 1, 1], [], []>} : vector<16x128xbf16>, vector<128x128xbf16>, vector<16x128xf32> -> vector<16x128xf32>
    %c0_11 = arith.constant 0 : index
    %c0_12 = arith.constant 0 : index
    %18 = vector.load %arg5[%c0_11, %c0_12] : memref<1x128xf32, #tpu.memory_space<vmem>>, vector<1x128xf32>
    %19 = vector.broadcast %18 : vector<1x128xf32> to vector<16x128xf32>
    %20 = arith.addf %17, %19 : vector<16x128xf32>
    %c0_13 = arith.constant 0 : index
    %c0_14 = arith.constant 0 : index
    %21 = vector.load %arg6[%c0_13, %c0_14] : memref<16x128xf32, #tpu.memory_space<vmem>>, vector<16x128xf32>
    tpu.vector_store %arg6[%c0_13, %c0_14], %20 {strides = array<i32>} : memref<16x128xf32, #tpu.memory_space<vmem>>, vector<16x128xf32>,
    return
  }
  func.func @transform_0(%arg0: i32) -> (i32, i32) {
    %c0_i32 = arith.constant 0 : i32
    %c0_i32_0 = arith.constant 0 : i32
    return %arg0, %c0_i32 : i32, i32
  }
  func.func @transform_1(%arg0: i32) -> (i32, i32) {
    %c0_i32 = arith.constant 0 : i32
    %c0_i32_0 = arith.constant 0 : i32
    %c0_i32_1 = arith.constant 0 : i32
    return %c0_i32, %c0_i32_0 : i32, i32
  }
  func.func @transform_2(%arg0: i32) -> (i32, i32) {
    %c0_i32 = arith.constant 0 : i32
    %c0_i32_0 = arith.constant 0 : i32
    %c0_i32_1 = arith.constant 0 : i32
    return %c0_i32, %c0_i32_0 : i32, i32
  }
  func.func @transform_3(%arg0: i32) -> (i32, i32) {
    %c0_i32 = arith.constant 0 : i32
    %c0_i32_0 = arith.constant 0 : i32
    %c0_i32_1 = arith.constant 0 : i32
    return %c0_i32, %c0_i32_0 : i32, i32
  }
  func.func @transform_4(%arg0: i32) -> (i32, i32) {
    %c0_i32 = arith.constant 0 : i32
    %c0_i32_0 = arith.constant 0 : i32
    %c0_i32_1 = arith.constant 0 : i32
    return %c0_i32, %c0_i32_0 : i32, i32
  }
  func.func @transform_5(%arg0: i32) -> (i32, i32) {
    %c0_i32 = arith.constant 0 : i32
    %c0_i32_0 = arith.constant 0 : i32
    return %arg0, %c0_i32 : i32, i32
  }
}

module attributes {stable_mosaic.version = 11 : i64} {
  func.func @_ff_kernel_resident(%arg0: i32, %arg1: memref<16x32xf32, #tpu.memory_space<vmem>>, %arg2: memref<32x128xbf16, #tpu.memory_space<vmem>>, %arg3: memref<1x128xf32, #tpu.memory_space<vmem>>, %arg4: memref<128x128xbf16, #tpu.memory_space<vmem>>, %arg5: memref<1x128xf32, #tpu.memory_space<vmem>>, %arg6: memref<16x128xf32, #tpu.memory_space<vmem>>) attributes {dimension_semantics = [#tpu.dimension_semantics<parallel>], iteration_bounds = array<i64: 1>, scalar_prefetch = 0 : i64, scratch_operands = 0 : i64, tpu.core_type = #tpu.core_type<tc>, window_params = [{transform_indices = @transform_0, window_bounds = array<i64: 16, 32>}, {pipeline_mode = #tpu.pipeline_mode<synchronous>, transform_indices = @transform_1, window_bounds = array<i64: 32, 128>}, {pipeline_mode = #tpu.pipeline_mode<synchronous>, transform_indices = @transform_2, window_bounds = array<i64: 1, 128>}, {pipeline_mode = #tpu.pipeline_mode<synchronous>, transform_indices = @transform_3, window_bounds = array<i64: 128, 128>}, {pipeline_mode = #tpu.pipeline_mode<synchronous>, transform_indices = @transform_4, window_bounds = array<i64: 1, 128>}, {transform_indices = @transform_5, window_bounds = array<i64: 16, 128>}]} {
    %c0 = arith.constant 0 : index
    %c0_0 = arith.constant 0 : index
    %0 = vector.load %arg1[%c0, %c0_0] : memref<16x32xf32, #tpu.memory_space<vmem>>, vector<16x32xf32>
    %1 = arith.truncf %0 : vector<16x32xf32> to vector<16x32xbf16>
    %c0_1 = arith.constant 0 : index
    %c0_2 = arith.constant 0 : index
    %2 = vector.load %arg2[%c0_1, %c0_2] : memref<32x128xbf16, #tpu.memory_space<vmem>>, vector<32x128xbf16>
    %cst = arith.constant dense<0.000000e+00> : vector<16x128xf32>
    %3 = tpu.matmul %1, %2, %cst {dimension_numbers = #tpu.dot_dimension_numbers<[1], [0], [0], [1], [0, 0, 1, 1], [], []>} : vector<16x32xbf16>, vector<32x128xbf16>, vector<16x128xf32> -> vector<16x128xf32>
    %c0_3 = arith.constant 0 : index
    %c0_4 = arith.constant 0 : index
    %4 = vector.load %arg3[%c0_3, %c0_4] : memref<1x128xf32, #tpu.memory_space<vmem>>, vector<1x128xf32>
    %5 = vector.broadcast %4 : vector<1x128xf32> to vector<16x128xf32>
    %6 = arith.addf %3, %5 : vector<16x128xf32>
    %cst_5 = arith.constant 5.000000e-01 : f32
    %7 = vector.broadcast %cst_5 : f32 to vector<16x128xf32>
    %8 = arith.mulf %7, %6 : vector<16x128xf32>
    %cst_6 = arith.constant 0.707106769 : f32
    %9 = vector.broadcast %cst_6 : f32 to vector<16x128xf32>
    %10 = arith.mulf %6, %9 : vector<16x128xf32>
    %11 = math.erf %10 : vector<16x128xf32>
    %cst_7 = arith.constant 1.000000e+00 : f32
    %12 = vector.broadcast %cst_7 : f32 to vector<16x128xf32>
    %13 = arith.addf %12, %11 : vector<16x128xf32>
    %14 = arith.mulf %8, %13 : vector<16x128xf32>
    %15 = arith.truncf %14 : vector<16x128xf32> to vector<16x128xbf16>
    %c0_8 = arith.constant 0 : index
    %c0_9 = arith.constant 0 : index
    %16 = vector.load %arg4[%c0_8, %c0_9] : memref<128x128xbf16, #tpu.memory_space<vmem>>, vector<128x128xbf16>
    %cst_10 = arith.constant dense<0.000000e+00> : vector<16x128xf32>
    %17 = tpu.matmul %15, %16, %cst_10 {dimension_numbers = #tpu.dot_dimension_numbers<[1], [0], [0], [1], [0, 0, 1, 1], [], []>} : vector<16x128xbf16>, vector<128x128xbf16>, vector<16x128xf32> -> vector<16x128xf32>
    %c0_11 = arith.constant 0 : index
    %c0_12 = arith.constant 0 : index
    %18 = vector.load %arg5[%c0_11, %c0_12] : memref<1x128xf32, #tpu.memory_space<vmem>>, vector<1x128xf32>
    %19 = vector.broadcast %18 : vector<1x128xf32> to vector<16x128xf32>
    %20 = arith.addf %17, %19 : vector<16x128xf32>
    %c0_13 = arith.constant 0 : index
    %c0_14 = arith.constant 0 : index
    %21 = vector.load %arg6[%c0_13, %c0_14] : memref<16x128xf32, #tpu.memory_space<vmem>>, vector<16x128xf32>
    tpu.vector_store %arg6[%c0_13, %c0_14], %20 {strides = array<i32>} : memref<16x128xf32, #tpu.memory_space<vmem>>, vector<16x128xf32>,
    return
  }
  func.func @transform_0(%arg0: i32) -> (i32, i32) {
    %c0_i32 = arith.constant 0 : i32
    %c0_i32_0 = arith.constant 0 : i32
    return %arg0, %c0_i32 : i32, i32
  }
  func.func @transform_1(%arg0: i32) -> (i32, i32) {
    %c0_i32 = arith.constant 0 : i32
    %c0_i32_0 = arith.constant 0 : i32
    %c0_i32_1 = arith.constant 0 : i32
    return %c0_i32, %c0_i32_0 : i32, i32
  }
  func.func @transform_2(%arg0: i32) -> (i32, i32) {
    %c0_i32 = arith.constant 0 : i32
    %c0_i32_0 = arith.constant 0 : i32
    %c0_i32_1 = arith.constant 0 : i32
    return %c0_i32, %c0_i32_0 : i32, i32
  }
  func.func @transform_3(%arg0: i32) -> (i32, i32) {
    %c0_i32 = arith.constant 0 : i32
    %c0_i32_0 = arith.constant 0 : i32
    %c0_i32_1 = arith.constant 0 : i32
    return %c0_i32, %c0_i32_0 : i32, i32
  }
  func.func @transform_4(%arg0: i32) -> (i32, i32) {
    %c0_i32 = arith.constant 0 : i32
    %c0_i32_0 = arith.constant 0 : i32
    %c0_i32_1 = arith.constant 0 : i32
    return %c0_i32, %c0_i32_0 : i32, i32
  }
  func.func @transform_5(%arg0: i32) -> (i32, i32) {
    %c0_i32 = arith.constant 0 : i32
    %c0_i32_0 = arith.constant 0 : i32
    return %arg0, %c0_i32 : i32, i32
  }
}

</mosaic_0001>

<llo_original>
// kernel: tpu_custom_call.1
$region0: #{tpu_custom_call.1}
  #allocation0 [shape = 'u32[]', space=smem, size = 0x4, offset = 0x4, fixed_abs, tag = 'smem constant byte address 0x4 - core index']
  #allocation1 [shape = 'u32[144,128]{1,0:T(1,128)}', space=vmem, size = 0x12000, scoped, tag = 'internal scratch']
  %s0 = inlined_call_operand.hbm [shape: f32[16,32], index: 0, kind: input, shape index: {}]
  %s1 = inlined_call_operand.hbm [shape: bf16[32,128], index: 1, kind: input, shape index: {}]
  %s2 = inlined_call_operand.vmem [shape: f32[1,128], index: 2, kind: input, shape index: {}]
  %s3 = inlined_call_operand.hbm [shape: bf16[128,128], index: 3, kind: input, shape index: {}]
  %s4 = inlined_call_operand.vmem [shape: f32[1,128], index: 4, kind: input, shape index: {}]
  %s5 = inlined_call_operand.hbm [shape: f32[16,128], index: 5, kind: output, shape index: {}]
  %s6 = sld [smem:[#allocation0]]
  $region42: #{tpu_custom_call.1} parent=0
    _
  %s8 = ssub.s32 1, %s6
  %s9 = scalar_select 0, %s8, %s6
  $region1: #{tpu_custom_call.1} parent=0
    #allocation2 [shape = 'u8[8192]{0}', space=vmem, size = 0x2000, scoped, tag = 'input window, operand 0, single buffered']
    #allocation3 [shape = 's32[1]{0}', space=sflag, size = 0x4, scoped, tag = 'scoped memory for tpu_custom_call.1']
    #allocation4 [shape = 's32[1]{0}', space=sflag, size = 0x4, scoped, tag = 'scoped memory for tpu_custom_call.1']
    #allocation5 [shape = 'u8[8192]{0}', space=vmem, size = 0x2000, scoped, tag = 'input window, operand 1, single buffered']
    #allocation6 [shape = 's32[1]{0}', space=sflag, size = 0x4, scoped, tag = 'scoped memory for tpu_custom_call.1']
    #allocation7 [shape = 'u8[32768]{0}', space=vmem, size = 0x8000, scoped, tag = 'input window, operand 3, single buffered']
    #allocation8 [shape = 'u8[8192]{0}', space=vmem, size = 0x2000, scoped, tag = 'output window, operand 0, single buffered']
    %10 = vsyncpa [#allocation3], 0
    %11 = vsyncpa [#allocation6], 0
    %12 = vsyncpa [#allocation4], 0
    // Predicated region
    $region2: #{tpu_custom_call.1} parent=1 // pred_check
      _
    $region3: #{tpu_custom_call.1} parent=1 // pred_check_branch
      %14 = sbr.rel (0) target = $region5
    $region4: #{tpu_custom_call.1} parent=1 // pred_region
      %s16 = ssub.s32 256, 256
      %17 = vsyncadd [#allocation3], %s16
      %s18 = sshll.u32 [#allocation2], 4
      %s19 = int_to_ptr.vmem [resolvable:$true] %s18
      %24 = dma.hbm_to_vmem [thread:$0]  %s0, 256, %s19, [#allocation3], 128, 128, 8
    $region5: #{tpu_custom_call.1} parent=1 // pred_fallthru
      _
    // Predicated region
    $region6: #{tpu_custom_call.1} parent=1 // pred_check
      _
    $region7: #{tpu_custom_call.1} parent=1 // pred_check_branch
      %26 = sbr.rel (0) target = $region9
    $region8: #{tpu_custom_call.1} parent=1 // pred_region
      %s28 = ssub.s32 256, 256
      %29 = vsyncadd [#allocation6], %s28
      %s30 = sshll.u32 [#allocation5], 4
      %s31 = int_to_ptr.vmem [resolvable:$true] %s30
      %36 = dma.hbm_to_vmem [thread:$0]  %s1, 256, %s31, [#allocation6], 64, 64, 4
    $region9: #{tpu_custom_call.1} parent=1 // pred_fallthru
      _
    // Predicated region
    $region10: #{tpu_custom_call.1} parent=1 // pred_check
      _
    $region11: #{tpu_custom_call.1} parent=1 // pred_check_branch
      %38 = sbr.rel (0) target = $region13
    $region12: #{tpu_custom_call.1} parent=1 // pred_region
      _
    $region13: #{tpu_custom_call.1} parent=1 // pred_fallthru
      _
    // Predicated region
    $region14: #{tpu_custom_call.1} parent=1 // pred_check
      _
    $region15: #{tpu_custom_call.1} parent=1 // pred_check_branch
      %40 = sbr.rel (0) target = $region17
    $region16: #{tpu_custom_call.1} parent=1 // pred_region
      %s42 = ssub.s32 1024, 1024
      %43 = vsyncadd [#allocation6], %s42
      %s44 = sshll.u32 [#allocation7], 4
      %s45 = int_to_ptr.vmem [resolvable:$true] %s44
      %50 = dma.hbm_to_vmem [thread:$0]  %s3, 1024, %s45, [#allocation6], 64, 64, 4
    $region17: #{tpu_custom_call.1} parent=1 // pred_fallthru
      _
    // Predicated region
    $region18: #{tpu_custom_call.1} parent=1 // pred_check
      _
    $region19: #{tpu_custom_call.1} parent=1 // pred_check_branch
      %52 = sbr.rel (0) target = $region21
    $region20: #{tpu_custom_call.1} parent=1 // pred_region
      _
    $region21: #{tpu_custom_call.1} parent=1 // pred_fallthru
      _
    // Predicated region
    $region22: #{tpu_custom_call.1} parent=1 // pred_check
      _
    $region23: #{tpu_custom_call.1} parent=1 // pred_check_branch
      %54 = sbr.rel (0) target = $region25
    $region24: #{tpu_custom_call.1} parent=1 // pred_region
      %55 = dma.done [#allocation3], 256
    $region25: #{tpu_custom_call.1} parent=1 // pred_fallthru
      _
    // Predicated region
    $region26: #{tpu_custom_call.1} parent=1 // pred_check
      _
    $region27: #{tpu_custom_call.1} parent=1 // pred_check_branch
      %57 = sbr.rel (0) target = $region29
    $region28: #{tpu_custom_call.1} parent=1 // pred_region
      %58 = dma.done [#allocation6], 256
    $region29: #{tpu_custom_call.1} parent=1 // pred_fallthru
      _
    // Predicated region
    $region30: #{tpu_custom_call.1} parent=1 // pred_check
      _
    $region31: #{tpu_custom_call.1} parent=1 // pred_check_branch
      %60 = sbr.rel (0) target = $region33
    $region32: #{tpu_custom_call.1} parent=1 // pred_region
      %61 = dma.done [#allocation6], 1024
    $region33: #{tpu_custom_call.1} parent=1 // pred_fallthru
      _
    %v63 = vld [vmem:[#allocation2] sm:$0xff]
    %v64 = vld [vmem:[#allocation2 + $0x8] sm:$0xff]
    %v65 = vpack.c.bf16 %v64, %v63
    %v66 = vld [vmem:[#allocation5] sm:$0xf]
    %v67 = vld [vmem:[#allocation5 + $0x4] sm:$0xf]
    %v68 = vld [vmem:[#allocation5 + $0x8] sm:$0xf]
    %v69 = vld [vmem:[#allocation5 + $0xc] sm:$0xf]
    %v70 = vld [vmem:[%s2] sm:$0x1]
    %v72 = vlaneseq
    %v73 = vshrl.u32 %v72, 7
    %v74 = vsub.s32 0, %v73
    %v75 = vrot.slane %v70, %v74
    %v81 = vunpack.c.l.b16 %v66
    %v82 = vunpack.c.l.b16 %v67
    %v83 = vunpack.c.l.b16 %v68
    %v84 = vunpack.c.l.b16 %v69
    %v85 = vpack.c.b16 %v82, %v81
    %v86 = vpack.c.b16 %v84, %v83
    %vm89 = vcmask 261120
    %v91 = vsel %vm89, %v65, 0
    %93 = vmatprep.subr.bf16.mxu0 0
    %94 = vmatpush1.bf16.msra.mxu0 %v85
    %95 = vmatprep.subr.bf16.mxu0 0
    %96 = vmatpush1.bf16.msra.mxu0 %v86
    %97 = vmatprep.subr.bf16.mxu0 0
    %98 = vmatpush1.bf16.msra.mxu0 0
    %99 = vmatprep.subr.bf16.mxu0 0
    %100 = vmatpush1.bf16.msra.mxu0 0
    %101 = vmatprep.subr.bf16.mxu0 0
    %102 = vmatpush1.bf16.msra.mxu0 0
    %103 = vmatprep.subr.bf16.mxu0 0
    %104 = vmatpush1.bf16.msra.mxu0 0
    %105 = vmatprep.subr.bf16.mxu0 0
    %106 = vmatpush1.bf16.msra.mxu0 0
    %107 = vmatprep.subr.bf16.mxu0 0
    %108 = vmatpush1.bf16.msra.mxu0 0
    %109 = vmatprep.subr.bf16.mxu0 0
    %110 = vmatpush1.bf16.msra.mxu0 0
    %111 = vmatprep.subr.bf16.mxu0 0
    %112 = vmatpush1.bf16.msra.mxu0 0
    %113 = vmatprep.subr.bf16.mxu0 0
    %114 = vmatpush1.bf16.msra.mxu0 0
    %115 = vmatprep.subr.bf16.mxu0 0
    %116 = vmatpush1.bf16.msra.mxu0 0
    %117 = vmatprep.subr.bf16.mxu0 0
    %118 = vmatpush1.bf16.msra.mxu0 0
    %119 = vmatprep.subr.bf16.mxu0 0
    %120 = vmatpush1.bf16.msra.mxu0 0
    %121 = vmatprep.subr.bf16.mxu0 0
    %122 = vmatpush1.bf16.msra.mxu0 0
    %123 = vmatprep.subr.bf16.mxu0 0
    %124 = vmatpush1.bf16.msra.mxu0 0
    %125 = vmatprep.mubr.bf16.mxu0 0
    %126 = vmatmul.mubr.bf16.gmra.mrb[0].mxu0 %v91
    %v127 = vpop.f32.mrb[0].mxu0
    %v128 = vadd.f32 %v75, %v127
    %v129 = vpop.f32.mrb[0].mxu0
    %v130 = vpop.f32.mrb[0].mxu0
    %v131 = vadd.f32 %v75, %v130
    %v132 = vpop.f32.mrb[0].mxu0
    %133 = vdwg.mxu0
    %v134 = vmul.f32 %v128, 0.5
    %v135 = vmul.f32 %v131, 0.5
    %v136 = vmul.f32 %v128, 0.70710677
    %v137 = vmul.f32 %v131, 0.70710677
    %v138 = verf.f32.pop %v136
    %v139 = verf.f32.pop %v137
    %v140 = vadd.f32 %v138, 1.0
    %v141 = vadd.f32 %v139, 1.0
    %v142 = vmul.f32 %v134, %v140
    %v143 = vmul.f32 %v135, %v141
    %v144 = vpack.c.bf16 %v143, %v142
    %v145 = vld [vmem:[#allocation7] sm:$0xf]
    %v146 = vld [vmem:[#allocation7 + $0x4] sm:$0xf]
    %v147 = vld [vmem:[#allocation7 + $0x8] sm:$0xf]
    %v148 = vld [vmem:[#allocation7 + $0xc] sm:$0xf]
    %v149 = vld [vmem:[#allocation7 + $0x10] sm:$0xf]
    %v150 = vld [vmem:[#allocation7 + $0x14] sm:$0xf]
    %v151 = vld [vmem:[#allocation7 + $0x18] sm:$0xf]
    %v152 = vld [vmem:[#allocation7 + $0x1c] sm:$0xf]
    %v153 = vld [vmem:[#allocation7 + $0x20] sm:$0xf]
    %v154 = vld [vmem:[#allocation7 + $0x24] sm:$0xf]
    %v155 = vld [vmem:[#allocation7 + $0x28] sm:$0xf]
    %v156 = vld [vmem:[#allocation7 + $0x2c] sm:$0xf]
    %v157 = vld [vmem:[#allocation7 + $0x30] sm:$0xf]
    %v158 = vld [vmem:[#allocation7 + $0x34] sm:$0xf]
    %v159 = vld [vmem:[#allocation7 + $0x38] sm:$0xf]
    %v160 = vld [vmem:[#allocation7 + $0x3c] sm:$0xf]
    %v161 = vld [vmem:[%s4] sm:$0x1]
    %v163 = vlaneseq
    %v164 = vshrl.u32 %v163, 7
    %v165 = vsub.s32 0, %v164
    %v166 = vrot.slane %v161, %v165
    %v184 = vunpack.c.l.b16 %v145
    %v185 = vunpack.c.l.b16 %v146
    %v186 = vunpack.c.l.b16 %v147
    %v187 = vunpack.c.l.b16 %v148
    %v188 = vunpack.c.l.b16 %v149
    %v189 = vunpack.c.l.b16 %v150
    %v190 = vunpack.c.l.b16 %v151
    %v191 = vunpack.c.l.b16 %v152
    %v192 = vunpack.c.l.b16 %v153
    %v193 = vunpack.c.l.b16 %v154
    %v194 = vunpack.c.l.b16 %v155
    %v195 = vunpack.c.l.b16 %v156
    %v196 = vunpack.c.l.b16 %v157
    %v197 = vunpack.c.l.b16 %v158
    %v198 = vunpack.c.l.b16 %v159
    %v199 = vunpack.c.l.b16 %v160
    %v200 = vpack.c.b16 %v185, %v184
    %v201 = vpack.c.b16 %v187, %v186
    %v202 = vpack.c.b16 %v189, %v188
    %v203 = vpack.c.b16 %v191, %v190
    %v204 = vpack.c.b16 %v193, %v192
    %v205 = vpack.c.b16 %v195, %v194
    %v206 = vpack.c.b16 %v197, %v196
    %v207 = vpack.c.b16 %v199, %v198
    %216 = vmatprep.subr.bf16.mxu0 0
    %217 = vmatpush1.bf16.msra.mxu0 %v200
    %218 = vmatprep.subr.bf16.mxu0 0
    %219 = vmatpush1.bf16.msra.mxu0 %v201
    %220 = vmatprep.subr.bf16.mxu0 0
    %221 = vmatpush1.bf16.msra.mxu0 %v202
    %222 = vmatprep.subr.bf16.mxu0 0
    %223 = vmatpush1.bf16.msra.mxu0 %v203
    %224 = vmatprep.subr.bf16.mxu0 0
    %225 = vmatpush1.bf16.msra.mxu0 %v204
    %226 = vmatprep.subr.bf16.mxu0 0
    %227 = vmatpush1.bf16.msra.mxu0 %v205
    %228 = vmatprep.subr.bf16.mxu0 0
    %229 = vmatpush1.bf16.msra.mxu0 %v206
    %230 = vmatprep.subr.bf16.mxu0 0
    %231 = vmatpush1.bf16.msra.mxu0 %v207
    %232 = vmatprep.subr.bf16.mxu0 0
    %233 = vmatpush1.bf16.msra.mxu0 0
    %234 = vmatprep.subr.bf16.mxu0 0
    %235 = vmatpush1.bf16.msra.mxu0 0
    %236 = vmatprep.subr.bf16.mxu0 0
    %237 = vmatpush1.bf16.msra.mxu0 0
    %238 = vmatprep.subr.bf16.mxu0 0
    %239 = vmatpush1.bf16.msra.mxu0 0
    %240 = vmatprep.subr.bf16.mxu0 0
    %241 = vmatpush1.bf16.msra.mxu0 0
    %242 = vmatprep.subr.bf16.mxu0 0
    %243 = vmatpush1.bf16.msra.mxu0 0
    %244 = vmatprep.subr.bf16.mxu0 0
    %245 = vmatpush1.bf16.msra.mxu0 0
    %246 = vmatprep.subr.bf16.mxu0 0
    %247 = vmatpush1.bf16.msra.mxu0 0
    %248 = vmatprep.mubr.bf16.mxu0 0
    %249 = vmatmul.mubr.bf16.gmra.mrb[0].mxu0 %v144
    %v250 = vpop.f32.mrb[0].mxu0
    %v251 = vadd.f32 %v166, %v250
    %v252 = vpop.f32.mrb[0].mxu0
    %v253 = vpop.f32.mrb[0].mxu0
    %v254 = vadd.f32 %v166, %v253
    %v255 = vpop.f32.mrb[0].mxu0
    %256 = vdwg.mxu0
    %257 = vst [vmem:[#allocation8] sm:$0xff] %v251
    %258 = vst [vmem:[#allocation8 + $0x8] sm:$0xff] %v254
    // Predicated region
    $region34: #{tpu_custom_call.1} parent=1 // pred_check
      _
    $region35: #{tpu_custom_call.1} parent=1 // pred_check_branch
      %260 = sbr.rel (0) target = $region37
    $region36: #{tpu_custom_call.1} parent=1 // pred_region
      %s262 = ssub.s32 256, 256
      %263 = vsyncadd [#allocation4], %s262
      %s264 = sshll.u32 [#allocation8], 4
      %s265 = int_to_ptr.vmem [resolvable:$true] %s264
      %270 = dma.vmem_to_hbm [thread:$0]  %s265, 256, %s5, [#allocation4], 128, 128, 8
    $region37: #{tpu_custom_call.1} parent=1 // pred_fallthru
      _
    // Predicated region
    $region38: #{tpu_custom_call.1} parent=1 // pred_check
      _
    $region39: #{tpu_custom_call.1} parent=1 // pred_check_branch
      %272 = sbr.rel (0) target = $region41
    $region40: #{tpu_custom_call.1} parent=1 // pred_region
      %273 = dma.done [#allocation4], 256
    $region41: #{tpu_custom_call.1} parent=1 // pred_fallthru
      _
    %274 = vsyncpa [#allocation3], 1
    %275 = vsyncpa [#allocation6], 1
    %276 = vsyncpa [#allocation4], 1

// kernel: tpu_custom_call.1
$region0: #{tpu_custom_call.1}
  #allocation0 [shape = 'u32[]', space=smem, size = 0x4, offset = 0x4, fixed_abs, tag = 'smem constant byte address 0x4 - core index']
  #allocation1 [shape = 'u32[144,128]{1,0:T(1,128)}', space=vmem, size = 0x12000, scoped, tag = 'internal scratch']
  %s0 = inlined_call_operand.hbm [shape: f32[16,32], index: 0, kind: input, shape index: {}]
  %s1 = inlined_call_operand.hbm [shape: bf16[32,128], index: 1, kind: input, shape index: {}]
  %s2 = inlined_call_operand.vmem [shape: f32[1,128], index: 2, kind: input, shape index: {}]
  %s3 = inlined_call_operand.hbm [shape: bf16[128,128], index: 3, kind: input, shape index: {}]
  %s4 = inlined_call_operand.vmem [shape: f32[1,128], index: 4, kind: input, shape index: {}]
  %s5 = inlined_call_operand.hbm [shape: f32[16,128], index: 5, kind: output, shape index: {}]
  %s6 = sld [smem:[#allocation0]]
  $region42: #{tpu_custom_call.1} parent=0
    _
  %s8 = ssub.s32 1, %s6
  %s9 = scalar_select 0, %s8, %s6
  $region1: #{tpu_custom_call.1} parent=0
    #allocation2 [shape = 'u8[8192]{0}', space=vmem, size = 0x2000, scoped, tag = 'input window, operand 0, single buffered']
    #allocation3 [shape = 's32[1]{0}', space=sflag, size = 0x4, scoped, tag = 'scoped memory for tpu_custom_call.1']
    #allocation4 [shape = 's32[1]{0}', space=sflag, size = 0x4, scoped, tag = 'scoped memory for tpu_custom_call.1']
    #allocation5 [shape = 'u8[8192]{0}', space=vmem, size = 0x2000, scoped, tag = 'input window, operand 1, single buffered']
    #allocation6 [shape = 's32[1]{0}', space=sflag, size = 0x4, scoped, tag = 'scoped memory for tpu_custom_call.1']
    #allocation7 [shape = 'u8[32768]{0}', space=vmem, size = 0x8000, scoped, tag = 'input window, operand 3, single buffered']
    #allocation8 [shape = 'u8[8192]{0}', space=vmem, size = 0x2000, scoped, tag = 'output window, operand 0, single buffered']
    %10 = vsyncpa [#allocation3], 0
    %11 = vsyncpa [#allocation6], 0
    %12 = vsyncpa [#allocation4], 0
    // Predicated region
    $region2: #{tpu_custom_call.1} parent=1 // pred_check
      _
    $region3: #{tpu_custom_call.1} parent=1 // pred_check_branch
      %14 = sbr.rel (0) target = $region5
    $region4: #{tpu_custom_call.1} parent=1 // pred_region
      %s16 = ssub.s32 256, 256
      %17 = vsyncadd [#allocation3], %s16
      %s18 = sshll.u32 [#allocation2], 4
      %s19 = int_to_ptr.vmem [resolvable:$true] %s18
      %24 = dma.hbm_to_vmem [thread:$0]  %s0, 256, %s19, [#allocation3], 128, 128, 8
    $region5: #{tpu_custom_call.1} parent=1 // pred_fallthru
      _
    // Predicated region
    $region6: #{tpu_custom_call.1} parent=1 // pred_check
      _
    $region7: #{tpu_custom_call.1} parent=1 // pred_check_branch
      %26 = sbr.rel (0) target = $region9
    $region8: #{tpu_custom_call.1} parent=1 // pred_region
      %s28 = ssub.s32 256, 256
      %29 = vsyncadd [#allocation6], %s28
      %s30 = sshll.u32 [#allocation5], 4
      %s31 = int_to_ptr.vmem [resolvable:$true] %s30
      %36 = dma.hbm_to_vmem [thread:$0]  %s1, 256, %s31, [#allocation6], 64, 64, 4
    $region9: #{tpu_custom_call.1} parent=1 // pred_fallthru
      _
    // Predicated region
    $region10: #{tpu_custom_call.1} parent=1 // pred_check
      _
    $region11: #{tpu_custom_call.1} parent=1 // pred_check_branch
      %38 = sbr.rel (0) target = $region13
    $region12: #{tpu_custom_call.1} parent=1 // pred_region
      _
    $region13: #{tpu_custom_call.1} parent=1 // pred_fallthru
      _
    // Predicated region
    $region14: #{tpu_custom_call.1} parent=1 // pred_check
      _
    $region15: #{tpu_custom_call.1} parent=1 // pred_check_branch
      %40 = sbr.rel (0) target = $region17
    $region16: #{tpu_custom_call.1} parent=1 // pred_region
      %s42 = ssub.s32 1024, 1024
      %43 = vsyncadd [#allocation6], %s42
      %s44 = sshll.u32 [#allocation7], 4
      %s45 = int_to_ptr.vmem [resolvable:$true] %s44
      %50 = dma.hbm_to_vmem [thread:$0]  %s3, 1024, %s45, [#allocation6], 64, 64, 4
    $region17: #{tpu_custom_call.1} parent=1 // pred_fallthru
      _
    // Predicated region
    $region18: #{tpu_custom_call.1} parent=1 // pred_check
      _
    $region19: #{tpu_custom_call.1} parent=1 // pred_check_branch
      %52 = sbr.rel (0) target = $region21
    $region20: #{tpu_custom_call.1} parent=1 // pred_region
      _
    $region21: #{tpu_custom_call.1} parent=1 // pred_fallthru
      _
    // Predicated region
    $region22: #{tpu_custom_call.1} parent=1 // pred_check
      _
    $region23: #{tpu_custom_call.1} parent=1 // pred_check_branch
      %54 = sbr.rel (0) target = $region25
    $region24: #{tpu_custom_call.1} parent=1 // pred_region
      %55 = dma.done [#allocation3], 256
    $region25: #{tpu_custom_call.1} parent=1 // pred_fallthru
      _
    // Predicated region
    $region26: #{tpu_custom_call.1} parent=1 // pred_check
      _
    $region27: #{tpu_custom_call.1} parent=1 // pred_check_branch
      %57 = sbr.rel (0) target = $region29
    $region28: #{tpu_custom_call.1} parent=1 // pred_region
      %58 = dma.done [#allocation6], 256
    $region29: #{tpu_custom_call.1} parent=1 // pred_fallthru
      _
    // Predicated region
    $region30: #{tpu_custom_call.1} parent=1 // pred_check
      _
    $region31: #{tpu_custom_call.1} parent=1 // pred_check_branch
      %60 = sbr.rel (0) target = $region33
    $region32: #{tpu_custom_call.1} parent=1 // pred_region
      %61 = dma.done [#allocation6], 1024
    $region33: #{tpu_custom_call.1} parent=1 // pred_fallthru
      _
    %v63 = vld [vmem:[#allocation2] sm:$0xff]
    %v64 = vld [vmem:[#allocation2 + $0x8] sm:$0xff]
    %v65 = vpack.c.bf16 %v64, %v63
    %v66 = vld [vmem:[#allocation5] sm:$0xf]
    %v67 = vld [vmem:[#allocation5 + $0x4] sm:$0xf]
    %v68 = vld [vmem:[#allocation5 + $0x8] sm:$0xf]
    %v69 = vld [vmem:[#allocation5 + $0xc] sm:$0xf]
    %v70 = vld [vmem:[%s2] sm:$0x1]
    %v72 = vlaneseq
    %v73 = vshrl.u32 %v72, 7
    %v74 = vsub.s32 0, %v73
    %v75 = vrot.slane %v70, %v74
    %v81 = vunpack.c.l.b16 %v66
    %v82 = vunpack.c.l.b16 %v67
    %v83 = vunpack.c.l.b16 %v68
    %v84 = vunpack.c.l.b16 %v69
    %v85 = vpack.c.b16 %v82, %v81
    %v86 = vpack.c.b16 %v84, %v83
    %vm89 = vcmask 261120
    %v91 = vsel %vm89, %v65, 0
    %93 = vmatprep.subr.bf16.mxu0 0
    %94 = vmatpush1.bf16.msra.mxu0 %v85
    %95 = vmatprep.subr.bf16.mxu0 0
    %96 = vmatpush1.bf16.msra.mxu0 %v86
    %97 = vmatprep.subr.bf16.mxu0 0
    %98 = vmatpush1.bf16.msra.mxu0 0
    %99 = vmatprep.subr.bf16.mxu0 0
    %100 = vmatpush1.bf16.msra.mxu0 0
    %101 = vmatprep.subr.bf16.mxu0 0
    %102 = vmatpush1.bf16.msra.mxu0 0
    %103 = vmatprep.subr.bf16.mxu0 0
    %104 = vmatpush1.bf16.msra.mxu0 0
    %105 = vmatprep.subr.bf16.mxu0 0
    %106 = vmatpush1.bf16.msra.mxu0 0
    %107 = vmatprep.subr.bf16.mxu0 0
    %108 = vmatpush1.bf16.msra.mxu0 0
    %109 = vmatprep.subr.bf16.mxu0 0
    %110 = vmatpush1.bf16.msra.mxu0 0
    %111 = vmatprep.subr.bf16.mxu0 0
    %112 = vmatpush1.bf16.msra.mxu0 0
    %113 = vmatprep.subr.bf16.mxu0 0
    %114 = vmatpush1.bf16.msra.mxu0 0
    %115 = vmatprep.subr.bf16.mxu0 0
    %116 = vmatpush1.bf16.msra.mxu0 0
    %117 = vmatprep.subr.bf16.mxu0 0
    %118 = vmatpush1.bf16.msra.mxu0 0
    %119 = vmatprep.subr.bf16.mxu0 0
    %120 = vmatpush1.bf16.msra.mxu0 0
    %121 = vmatprep.subr.bf16.mxu0 0
    %122 = vmatpush1.bf16.msra.mxu0 0
    %123 = vmatprep.subr.bf16.mxu0 0
    %124 = vmatpush1.bf16.msra.mxu0 0
    %125 = vmatprep.mubr.bf16.mxu0 0
    %126 = vmatmul.mubr.bf16.gmra.mrb[0].mxu0 %v91
    %v127 = vpop.f32.mrb[0].mxu0
    %v128 = vadd.f32 %v75, %v127
    %v129 = vpop.f32.mrb[0].mxu0
    %v130 = vpop.f32.mrb[0].mxu0
    %v131 = vadd.f32 %v75, %v130
    %v132 = vpop.f32.mrb[0].mxu0
    %133 = vdwg.mxu0
    %v134 = vmul.f32 %v128, 0.5
    %v135 = vmul.f32 %v131, 0.5
    %v136 = vmul.f32 %v128, 0.70710677
    %v137 = vmul.f32 %v131, 0.70710677
    %v138 = verf.f32.pop %v136
    %v139 = verf.f32.pop %v137
    %v140 = vadd.f32 %v138, 1.0
    %v141 = vadd.f32 %v139, 1.0
    %v142 = vmul.f32 %v134, %v140
    %v143 = vmul.f32 %v135, %v141
    %v144 = vpack.c.bf16 %v143, %v142
    %v145 = vld [vmem:[#allocation7] sm:$0xf]
    %v146 = vld [vmem:[#allocation7 + $0x4] sm:$0xf]
    %v147 = vld [vmem:[#allocation7 + $0x8] sm:$0xf]
    %v148 = vld [vmem:[#allocation7 + $0xc] sm:$0xf]
    %v149 = vld [vmem:[#allocation7 + $0x10] sm:$0xf]
    %v150 = vld [vmem:[#allocation7 + $0x14] sm:$0xf]
    %v151 = vld [vmem:[#allocation7 + $0x18] sm:$0xf]
    %v152 = vld [vmem:[#allocation7 + $0x1c] sm:$0xf]
    %v153 = vld [vmem:[#allocation7 + $0x20] sm:$0xf]
    %v154 = vld [vmem:[#allocation7 + $0x24] sm:$0xf]
    %v155 = vld [vmem:[#allocation7 + $0x28] sm:$0xf]
    %v156 = vld [vmem:[#allocation7 + $0x2c] sm:$0xf]
    %v157 = vld [vmem:[#allocation7 + $0x30] sm:$0xf]
    %v158 = vld [vmem:[#allocation7 + $0x34] sm:$0xf]
    %v159 = vld [vmem:[#allocation7 + $0x38] sm:$0xf]
    %v160 = vld [vmem:[#allocation7 + $0x3c] sm:$0xf]
    %v161 = vld [vmem:[%s4] sm:$0x1]
    %v163 = vlaneseq
    %v164 = vshrl.u32 %v163, 7
    %v165 = vsub.s32 0, %v164
    %v166 = vrot.slane %v161, %v165
    %v184 = vunpack.c.l.b16 %v145
    %v185 = vunpack.c.l.b16 %v146
    %v186 = vunpack.c.l.b16 %v147
    %v187 = vunpack.c.l.b16 %v148
    %v188 = vunpack.c.l.b16 %v149
    %v189 = vunpack.c.l.b16 %v150
    %v190 = vunpack.c.l.b16 %v151
    %v191 = vunpack.c.l.b16 %v152
    %v192 = vunpack.c.l.b16 %v153
    %v193 = vunpack.c.l.b16 %v154
    %v194 = vunpack.c.l.b16 %v155
    %v195 = vunpack.c.l.b16 %v156
    %v196 = vunpack.c.l.b16 %v157
    %v197 = vunpack.c.l.b16 %v158
    %v198 = vunpack.c.l.b16 %v159
    %v199 = vunpack.c.l.b16 %v160
    %v200 = vpack.c.b16 %v185, %v184
    %v201 = vpack.c.b16 %v187, %v186
    %v202 = vpack.c.b16 %v189, %v188
    %v203 = vpack.c.b16 %v191, %v190
    %v204 = vpack.c.b16 %v193, %v192
    %v205 = vpack.c.b16 %v195, %v194
    %v206 = vpack.c.b16 %v197, %v196
    %v207 = vpack.c.b16 %v199, %v198
    %216 = vmatprep.subr.bf16.mxu0 0
    %217 = vmatpush1.bf16.msra.mxu0 %v200
    %218 = vmatprep.subr.bf16.mxu0 0
    %219 = vmatpush1.bf16.msra.mxu0 %v201
    %220 = vmatprep.subr.bf16.mxu0 0
    %221 = vmatpush1.bf16.msra.mxu0 %v202
    %222 = vmatprep.subr.bf16.mxu0 0
    %223 = vmatpush1.bf16.msra.mxu0 %v203
    %224 = vmatprep.subr.bf16.mxu0 0
    %225 = vmatpush1.bf16.msra.mxu0 %v204
    %226 = vmatprep.subr.bf16.mxu0 0
    %227 = vmatpush1.bf16.msra.mxu0 %v205
    %228 = vmatprep.subr.bf16.mxu0 0
    %229 = vmatpush1.bf16.msra.mxu0 %v206
    %230 = vmatprep.subr.bf16.mxu0 0
    %231 = vmatpush1.bf16.msra.mxu0 %v207
    %232 = vmatprep.subr.bf16.mxu0 0
    %233 = vmatpush1.bf16.msra.mxu0 0
    %234 = vmatprep.subr.bf16.mxu0 0
    %235 = vmatpush1.bf16.msra.mxu0 0
    %236 = vmatprep.subr.bf16.mxu0 0
    %237 = vmatpush1.bf16.msra.mxu0 0
    %238 = vmatprep.subr.bf16.mxu0 0
    %239 = vmatpush1.bf16.msra.mxu0 0
    %240 = vmatprep.subr.bf16.mxu0 0
    %241 = vmatpush1.bf16.msra.mxu0 0
    %242 = vmatprep.subr.bf16.mxu0 0
    %243 = vmatpush1.bf16.msra.mxu0 0
    %244 = vmatprep.subr.bf16.mxu0 0
    %245 = vmatpush1.bf16.msra.mxu0 0
    %246 = vmatprep.subr.bf16.mxu0 0
    %247 = vmatpush1.bf16.msra.mxu0 0
    %248 = vmatprep.mubr.bf16.mxu0 0
    %249 = vmatmul.mubr.bf16.gmra.mrb[0].mxu0 %v144
    %v250 = vpop.f32.mrb[0].mxu0
    %v251 = vadd.f32 %v166, %v250
    %v252 = vpop.f32.mrb[0].mxu0
    %v253 = vpop.f32.mrb[0].mxu0
    %v254 = vadd.f32 %v166, %v253
    %v255 = vpop.f32.mrb[0].mxu0
    %256 = vdwg.mxu0
    %257 = vst [vmem:[#allocation8] sm:$0xff] %v251
    %258 = vst [vmem:[#allocation8 + $0x8] sm:$0xff] %v254
    // Predicated region
    $region34: #{tpu_custom_call.1} parent=1 // pred_check
      _
    $region35: #{tpu_custom_call.1} parent=1 // pred_check_branch
      %260 = sbr.rel (0) target = $region37
    $region36: #{tpu_custom_call.1} parent=1 // pred_region
      %s262 = ssub.s32 256, 256
      %263 = vsyncadd [#allocation4], %s262
      %s264 = sshll.u32 [#allocation8], 4
      %s265 = int_to_ptr.vmem [resolvable:$true] %s264
      %270 = dma.vmem_to_hbm [thread:$0]  %s265, 256, %s5, [#allocation4], 128, 128, 8
    $region37: #{tpu_custom_call.1} parent=1 // pred_fallthru
      _
    // Predicated region
    $region38: #{tpu_custom_call.1} parent=1 // pred_check
      _
    $region39: #{tpu_custom_call.1} parent=1 // pred_check_branch
      %272 = sbr.rel (0) target = $region41
    $region40: #{tpu_custom_call.1} parent=1 // pred_region
      %273 = dma.done [#allocation4], 256
    $region41: #{tpu_custom_call.1} parent=1 // pred_fallthru
      _
    %274 = vsyncpa [#allocation3], 1
    %275 = vsyncpa [#allocation6], 1
    %276 = vsyncpa [#allocation4], 1

</llo_original>
